<compile_context>
chip_gen: v5e
topology: v5e:2x2
jax: 0.10.0
libtpu: 0.0.40
codegen_flags: <defaults>
</compile_context>

<pallas_src>
import jax
import jax.numpy as jnp
from jax.experimental import pallas as pl
from jax.experimental.pallas import tpu as pltpu


def _focal_factor(omp, gamma):
    # omp = 1 - pt  (>= 0 because ce is clamped to >= 0)
    gamma = float(gamma)
    if gamma == 0.0:
        return jnp.ones_like(omp)
    if gamma.is_integer() and 0.0 < gamma <= 8.0:
        # pure VALU: no EUP exp/log pair, no NaN hazard
        return jax.lax.integer_pow(omp, int(gamma))
    # non-integer gamma: clamp base so log() never sees a negative
    return jnp.power(jnp.maximum(omp, 0.0), gamma)


def _per_row_focal_loss(logits, tgt, alpha, gamma):
    """logits (tn, C) f32, tgt (tn, 1) i32, alpha (1, C) f32 -> (tn, 1) f32."""
    tn, C = logits.shape

    # numerically stable log-sum-exp over classes
    m = jnp.max(logits, axis=-1, keepdims=True)                          # (tn, 1)
    lse = m + jnp.log(jnp.sum(jnp.exp(logits - m), axis=-1,
                              keepdims=True))                            # (tn, 1)

    # one-hot gather of the target logit and of alpha[target]
    class_idx = jax.lax.broadcasted_iota(jnp.int32, (tn, C), 1)          # (tn, C)
    onehot = (class_idx == tgt).astype(jnp.float32)                      # (tn, C)
    logit_t = jnp.sum(logits * onehot, axis=-1, keepdims=True)           # (tn, 1)
    alpha_t = jnp.sum(alpha * onehot, axis=-1, keepdims=True)            # (tn, 1)

    ce = jnp.maximum(lse - logit_t, 0.0)                                 # (tn, 1)
    pt = jnp.exp(-ce)
    return alpha_t * _focal_factor(1.0 - pt, gamma) * ce                 # (tn, 1)


def _make_reduce_kernel(gamma, n_actual, tile_n, scale):
    def kernel(logits_ref, targets_ref, alpha_ref, out_ref, acc_ref):
        step = pl.program_id(0)

        @pl.when(step == 0)
        def _init():
            acc_ref[0] = jnp.float32(0.0)

        logits = logits_ref[...].astype(jnp.float32)     # (tile_n, C)
        tgt = targets_ref[...]                           # (tile_n, 1) int32
        alpha = alpha_ref[...].astype(jnp.float32)       # (1, C)

        loss = _per_row_focal_loss(logits, tgt, alpha, gamma)

        # mask rows past the true N (ragged last tile: Pallas pads the input
        # block with undefined data; the select discards any NaN/Inf there)
        row = step * tile_n + jax.lax.broadcasted_iota(jnp.int32, loss.shape, 0)
        loss = jnp.where(row < n_actual, loss, 0.0)

        acc_ref[0] += jnp.sum(loss)

        @pl.when(step == pl.num_programs(0) - 1)
        def _finalize():
            out_ref[0, 0] = acc_ref[0] * jnp.float32(scale)

    return kernel


def _make_elementwise_kernel(gamma):
    def kernel(logits_ref, targets_ref, alpha_ref, out_ref):
        logits = logits_ref[...].astype(jnp.float32)
        tgt = targets_ref[...]
        alpha = alpha_ref[...].astype(jnp.float32)
        # padded (out-of-bounds) output rows are never written back, so no mask
        out_ref[...] = _per_row_focal_loss(logits, tgt, alpha, gamma)

    return kernel


def focal_loss(logits, targets, alpha=None, gamma=2.0, reduction="mean",
               tile_n=None):
    """logits: (N, C) float (f32 or bf16), targets: (N,) int, alpha: (C,) or None."""
    N, C = logits.shape

    if alpha is None:
        alpha_vec = jnp.ones((C,), dtype=jnp.float32)
    else:
        alpha_vec = jnp.asarray(alpha, dtype=jnp.float32).reshape(-1)
        if alpha_vec.shape[0] == 1:
            alpha_vec = jnp.broadcast_to(alpha_vec, (C,))
    alpha_2d = alpha_vec.reshape(1, C)
    targets_2d = jnp.asarray(targets, dtype=jnp.int32).reshape(N, 1)

    itemsize = jnp.dtype(logits.dtype).itemsize

    # Tile sizing: ~4 MiB per logits buffer (x2 for double buffering) fits the
    # scoped-VMEM budget on v5e/v6e/v7x with plenty of headroom.
    if tile_n is None:
        rows = (4 << 20) // max(1, C * itemsize)
        rows = max(8, (rows // 8) * 8)
        tile_n = int(min(rows, 8192))
    tile_n = max(8, (int(tile_n) // 8) * 8)
    tile_n = min(tile_n, ((N + 7) // 8) * 8)          # don't over-pad tiny N
    grid_n = pl.cdiv(N, tile_n)

    cost = pl.CostEstimate(
        flops=8 * N * C,
        transcendentals=N * (C + 2),
        bytes_accessed=N * C * itemsize + N * 4 + C * 4 + 4 * N,
    )

    in_specs = [
        pl.BlockSpec((tile_n, C), lambda i: (i, 0)),   # logits tile (streamed)
        pl.BlockSpec((tile_n, 1), lambda i: (i, 0)),   # targets tile
        pl.BlockSpec((1, C), lambda i: (0, 0)),        # alpha (resident)
    ]

    if reduction in ("mean", "sum"):
        scale = (1.0 / N) if reduction == "mean" else 1.0
        out = pl.pallas_call(
            _make_reduce_kernel(float(gamma), N, tile_n, scale),
            out_shape=jax.ShapeDtypeStruct((1, 1), jnp.float32),
            grid=(grid_n,),
            in_specs=in_specs,
            out_specs=pl.BlockSpec((1, 1), lambda i: (0, 0),
                                   memory_space=pltpu.MemorySpace.SMEM),
            scratch_shapes=[pltpu.SMEM((1,), jnp.float32)],   # cross-tile accumulator
            compiler_params=pltpu.CompilerParams(
                dimension_semantics=("arbitrary",),           # reduction axis
                vmem_limit_bytes=32 << 20,
            ),
            cost_estimate=cost,
        )(logits, targets_2d, alpha_2d)
        return out[0, 0]
    elif reduction == "none":
        out = pl.pallas_call(
            _make_elementwise_kernel(float(gamma)),
            out_shape=jax.ShapeDtypeStruct((N, 1), jnp.float32),
            grid=(grid_n,),
            in_specs=in_specs,
            out_specs=pl.BlockSpec((tile_n, 1), lambda i: (i, 0)),
            compiler_params=pltpu.CompilerParams(
                dimension_semantics=("parallel",),
                vmem_limit_bytes=32 << 20,
            ),
            cost_estimate=cost,
        )(logits, targets_2d, alpha_2d)
        return out.reshape(N)
    else:
        raise ValueError(f"unknown reduction: {reduction!r}")


def focal_loss_ref(logits, targets, alpha, gamma=2.0, reduction="mean"):
    # pure-JAX reference of the PyTorch forward
    logits = logits.astype(jnp.float32)
    lse = jax.nn.logsumexp(logits, axis=-1)
    logit_t = jnp.take_along_axis(logits, targets[:, None], axis=-1)[:, 0]
    ce = jnp.maximum(lse - logit_t, 0.0)
    pt = jnp.exp(-ce)
    alpha_t = alpha[targets]
    loss = alpha_t * (1.0 - pt) ** gamma * ce
    if reduction == "mean":
        return loss.mean()
    if reduction == "sum":
        return loss.sum()
    return loss


if __name__ == "__main__":
    key = jax.random.PRNGKey(0)
    k1, k2, k3, k4 = jax.random.split(key, 4)
    gamma = 2.0

    # Small case (single tile) — matches the module's (N, C) contract.
    N, C = 8, 16
    logits = jax.random.normal(k1, (N, C), dtype=jnp.float32)
    targets = jax.random.randint(k2, (N,), 0, C, dtype=jnp.int32)
    alpha = jnp.ones((C,), dtype=jnp.float32)   # alpha=None equivalent (unweighted)

    out = jax.block_until_ready(focal_loss(logits, targets, alpha, gamma=gamma))
    ref = focal_loss_ref(logits, targets, alpha, gamma=gamma)
    assert jnp.allclose(out, ref, rtol=1e-5, atol=1e-6), (out, ref)

    # Non-divisible N — exercises the ragged last tile, in-kernel masking and
    # the cross-tile accumulator (no host-side padding copy).
    N2, C2 = 200, 32
    logits2 = jax.random.normal(k3, (N2, C2), dtype=jnp.float32)
    targets2 = jax.random.randint(k4, (N2,), 0, C2, dtype=jnp.int32)
    alpha2 = jnp.linspace(0.5, 1.5, C2).astype(jnp.float32)

    out_mean = jax.block_until_ready(
        focal_loss(logits2, targets2, alpha2, gamma=gamma, tile_n=64))
    ref_mean = focal_loss_ref(logits2, targets2, alpha2, gamma=gamma)
    assert jnp.allclose(out_mean, ref_mean, rtol=1e-5, atol=1e-6), (out_mean, ref_mean)

    out_sum = jax.block_until_ready(
        focal_loss(logits2, targets2, alpha2, gamma=gamma, reduction="sum", tile_n=64))
    ref_sum = focal_loss_ref(logits2, targets2, alpha2, gamma=gamma, reduction="sum")
    assert jnp.allclose(out_sum, ref_sum, rtol=1e-5, atol=1e-4), (out_sum, ref_sum)

    out_none = jax.block_until_ready(
        focal_loss(logits2, targets2, alpha2, gamma=gamma, reduction="none", tile_n=64))
    ref_none = focal_loss_ref(logits2, targets2, alpha2, gamma=gamma, reduction="none")
    assert out_none.shape == (N2,)
    assert jnp.allclose(out_none, ref_none, rtol=1e-5, atol=1e-6)

    print("KERNEL_OK")
</pallas_src>

<mosaic_0001>
module attributes {stable_mosaic.version = 11 : i64} {
  func.func @kernel(%arg0: i32, %arg1: memref<8x16xf32, #tpu.memory_space<vmem>>, %arg2: memref<8x1xi32, #tpu.memory_space<vmem>>, %arg3: memref<1x16xf32, #tpu.memory_space<vmem>>, %arg4: memref<1x1xf32, #tpu.memory_space<smem>>, %arg5: memref<1xf32, #tpu.memory_space<smem>>) attributes {dimension_semantics = [#tpu.dimension_semantics<arbitrary>], iteration_bounds = array<i64: 1>, scalar_prefetch = 0 : i64, scratch_operands = 1 : i64, tpu.core_type = #tpu.core_type<tc>, window_params = [{transform_indices = @transform_0, window_bounds = array<i64: 8, 16>}, {transform_indices = @transform_1, window_bounds = array<i64: 8, 1>}, {pipeline_mode = #tpu.pipeline_mode<synchronous>, transform_indices = @transform_2, window_bounds = array<i64: 1, 16>}, {transform_indices = @transform_3, window_bounds = array<i64: 1, 1>}]} {
    %c0_i32 = arith.constant 0 : i32
    %0 = arith.cmpi eq, %arg0, %c0_i32 : i32
    %1 = arith.extui %0 : i1 to i32
    %c0_i32_0 = arith.constant 0 : i32
    %2 = arith.cmpi ne, %1, %c0_i32_0 : i32
    scf.if %2 {
      %cst_19 = arith.constant 0.000000e+00 : f32
      %c0_20 = arith.constant 0 : index
      %56 = memref.load %arg5[%c0_20] : memref<1xf32, #tpu.memory_space<smem>>
      memref.store %cst_19, %arg5[%c0_20] : memref<1xf32, #tpu.memory_space<smem>>
    } else {
    }
    %c0 = arith.constant 0 : index
    %c0_1 = arith.constant 0 : index
    %3 = vector.load %arg1[%c0, %c0_1] : memref<8x16xf32, #tpu.memory_space<vmem>>, vector<8x16xf32>
    %c0_2 = arith.constant 0 : index
    %c0_3 = arith.constant 0 : index
    %4 = vector.load %arg2[%c0_2, %c0_3] : memref<8x1xi32, #tpu.memory_space<vmem>>, vector<8x1xi32>
    %c0_4 = arith.constant 0 : index
    %c0_5 = arith.constant 0 : index
    %5 = vector.load %arg3[%c0_4, %c0_5] : memref<1x16xf32, #tpu.memory_space<vmem>>, vector<1x16xf32>
    %cst = arith.constant dense<0xFF800000> : vector<8xf32>
    %6 = vector.multi_reduction <maximumf>, %3, %cst [1] : vector<8x16xf32> to vector<8xf32>
    %7 = vector.shape_cast %6 : vector<8xf32> to vector<8x1xf32>
    %8 = vector.broadcast %7 : vector<8x1xf32> to vector<8x16xf32>
    %9 = arith.subf %3, %8 : vector<8x16xf32>
    %10 = math.exp %9 : vector<8x16xf32>
    %cst_6 = arith.constant dense<0.000000e+00> : vector<8xf32>
    %11 = vector.multi_reduction <add>, %10, %cst_6 [1] : vector<8x16xf32> to vector<8xf32>
    %12 = vector.shape_cast %11 : vector<8xf32> to vector<8x1xf32>
    %13 = math.log %12 : vector<8x1xf32>
    %14 = arith.addf %7, %13 : vector<8x1xf32>
    %15 = tpu.iota {dimensions = array<i32: 1>} : vector<8x16xi32>
    %16 = vector.broadcast %4 : vector<8x1xi32> to vector<8x16xi32>
    %17 = arith.cmpi eq, %15, %16 : vector<8x16xi32>
    %18 = arith.extui %17 : vector<8x16xi1> to vector<8x16xi32>
    %19 = arith.sitofp %18 : vector<8x16xi32> to vector<8x16xf32>
    %20 = arith.mulf %3, %19 : vector<8x16xf32>
    %cst_7 = arith.constant dense<0.000000e+00> : vector<8xf32>
    %21 = vector.multi_reduction <add>, %20, %cst_7 [1] : vector<8x16xf32> to vector<8xf32>
    %22 = vector.shape_cast %21 : vector<8xf32> to vector<8x1xf32>
    %23 = vector.broadcast %5 : vector<1x16xf32> to vector<8x16xf32>
    %24 = arith.mulf %23, %19 : vector<8x16xf32>
    %cst_8 = arith.constant dense<0.000000e+00> : vector<8xf32>
    %25 = vector.multi_reduction <add>, %24, %cst_8 [1] : vector<8x16xf32> to vector<8xf32>
    %26 = vector.shape_cast %25 : vector<8xf32> to vector<8x1xf32>
    %27 = arith.subf %14, %22 : vector<8x1xf32>
    %cst_9 = arith.constant 0.000000e+00 : f32
    %28 = vector.broadcast %cst_9 : f32 to vector<8x1xf32>
    %29 = arith.maximumf %27, %28 : vector<8x1xf32>
    %cst_10 = arith.constant 0.000000e+00 : f32
    %30 = vector.broadcast %cst_10 : f32 to vector<8x1xf32>
    %31 = arith.subf %30, %29 : vector<8x1xf32>
    %32 = math.exp %31 : vector<8x1xf32>
    %cst_11 = arith.constant 1.000000e+00 : f32
    %33 = vector.broadcast %cst_11 : f32 to vector<8x1xf32>
    %34 = arith.subf %33, %32 : vector<8x1xf32>
    %35 = arith.mulf %34, %34 : vector<8x1xf32>
    %36 = arith.mulf %26, %35 : vector<8x1xf32>
    %37 = arith.mulf %36, %29 : vector<8x1xf32>
    %c8_i32 = arith.constant 8 : i32
    %38 = arith.muli %arg0, %c8_i32 : i32
    %39 = tpu.iota {dimensions = array<i32: 0>} : vector<8x1xi32>
    %40 = vector.broadcast %38 : i32 to vector<8x1xi32>
    %41 = arith.addi %40, %39 : vector<8x1xi32>
    %c8_i32_12 = arith.constant 8 : i32
    %42 = vector.broadcast %c8_i32_12 : i32 to vector<8x1xi32>
    %43 = arith.cmpi slt, %41, %42 : vector<8x1xi32>
    %cst_13 = arith.constant 0.000000e+00 : f32
    %44 = vector.broadcast %cst_13 : f32 to vector<8x1xf32>
    %45 = arith.select %43, %37, %44 : vector<8x1xi1>, vector<8x1xf32>
    %c0_14 = arith.constant 0 : index
    %46 = memref.load %arg5[%c0_14] : memref<1xf32, #tpu.memory_space<smem>>
    %47 = vector.shape_cast %45 : vector<8x1xf32> to vector<1x8x1xf32>
    %cst_15 = arith.constant dense<0.000000e+00> : vector<1xf32>
    %48 = vector.multi_reduction <add>, %47, %cst_15 [1, 2] : vector<1x8x1xf32> to vector<1xf32>
    %49 = vector.shape_cast %48 : vector<1xf32> to vector<1x1x1xf32>
    %50 = vector.extract %49[0, 0, 0] : f32 from vector<1x1x1xf32>
    %51 = arith.addf %46, %50 : f32
    %c0_16 = arith.constant 0 : index
    %52 = memref.load %arg5[%c0_16] : memref<1xf32, #tpu.memory_space<smem>>
    memref.store %51, %arg5[%c0_16] : memref<1xf32, #tpu.memory_space<smem>>
    %c0_i32_17 = arith.constant 0 : i32
    %53 = arith.cmpi eq, %arg0, %c0_i32_17 : i32
    %54 = arith.extui %53 : i1 to i32
    %c0_i32_18 = arith.constant 0 : i32
    %55 = arith.cmpi ne, %54, %c0_i32_18 : i32
    scf.if %55 {
      %c0_19 = arith.constant 0 : index
      %56 = memref.load %arg5[%c0_19] : memref<1xf32, #tpu.memory_space<smem>>
      %cst_20 = arith.constant 1.250000e-01 : f32
      %57 = arith.mulf %56, %cst_20 : f32
      %c0_21 = arith.constant 0 : index
      %c0_22 = arith.constant 0 : index
      %58 = memref.load %arg4[%c0_21, %c0_22] : memref<1x1xf32, #tpu.memory_space<smem>>
      memref.store %57, %arg4[%c0_21, %c0_22] : memref<1x1xf32, #tpu.memory_space<smem>>
    } else {
    }
    return
  }
  func.func @transform_0(%arg0: i32) -> (i32, i32) {
    %c0_i32 = arith.constant 0 : i32
    %c0_i32_0 = arith.constant 0 : i32
    return %arg0, %c0_i32 : i32, i32
  }
  func.func @transform_1(%arg0: i32) -> (i32, i32) {
    %c0_i32 = arith.constant 0 : i32
    %c0_i32_0 = arith.constant 0 : i32
    return %arg0, %c0_i32 : i32, i32
  }
  func.func @transform_2(%arg0: i32) -> (i32, i32) {
    %c0_i32 = arith.constant 0 : i32
    %c0_i32_0 = arith.constant 0 : i32
    %c0_i32_1 = arith.constant 0 : i32
    return %c0_i32, %c0_i32_0 : i32, i32
  }
  func.func @transform_3(%arg0: i32) -> (i32, i32) {
    %c0_i32 = arith.constant 0 : i32
    %c0_i32_0 = arith.constant 0 : i32
    %c0_i32_1 = arith.constant 0 : i32
    return %c0_i32, %c0_i32_0 : i32, i32
  }
}

</mosaic_0001>

<llo_original>
// kernel: tpu_custom_call.1
$region0: #{tpu_custom_call.1}
  #allocation0 [shape = 'u32[]', space=smem, size = 0x4, offset = 0x4, fixed_abs, tag = 'smem constant byte address 0x4 - core index']
  #allocation1 [shape = 'u32[72,128]{1,0:T(1,128)}', space=vmem, size = 0x9000, scoped, tag = 'internal scratch']
  #allocation2 [shape = 'f32[1]{0:T(128)}', space=smem, size = 0x200, scoped, tag = 'scratch operand']
  %s0 = inlined_call_operand.vmem [shape: f32[8,16], index: 0, kind: input, shape index: {}]
  %s1 = inlined_call_operand.vmem [shape: s32[8,1], index: 1, kind: input, shape index: {}]
  %s2 = inlined_call_operand.vmem [shape: f32[1,16], index: 2, kind: input, shape index: {}]
  %s3 = inlined_call_operand.hbm [shape: f32[1,1], index: 3, kind: output, shape index: {}]
  %s4 = sld [smem:[#allocation0]]
  $region30: #{tpu_custom_call.1} parent=0
    _
  %s6 = ssub.s32 1, %s4
  %s7 = scalar_select 0, %s6, %s4
  $region1: #{tpu_custom_call.1} parent=0
    #allocation3 [shape = 'u8[512]{0}', space=smem, size = 0x200, scoped, tag = 'output window, operand 0, single buffered']
    #allocation4 [shape = 's32[1]{0}', space=sflag, size = 0x4, scoped, tag = 'scoped memory for tpu_custom_call.1']
    %8 = vsyncpa [#allocation4], 0
    // Predicated region
    $region2: #{tpu_custom_call.1} parent=1 // pred_check
      _
    $region3: #{tpu_custom_call.1} parent=1 // pred_check_branch
      %10 = sbr.rel (0) target = $region5
    $region4: #{tpu_custom_call.1} parent=1 // pred_region
      _
    $region5: #{tpu_custom_call.1} parent=1 // pred_fallthru
      _
    // Predicated region
    $region6: #{tpu_custom_call.1} parent=1 // pred_check
      _
    $region7: #{tpu_custom_call.1} parent=1 // pred_check_branch
      %12 = sbr.rel (0) target = $region9
    $region8: #{tpu_custom_call.1} parent=1 // pred_region
      _
    $region9: #{tpu_custom_call.1} parent=1 // pred_fallthru
      _
    // Predicated region
    $region10: #{tpu_custom_call.1} parent=1 // pred_check
      _
    $region11: #{tpu_custom_call.1} parent=1 // pred_check_branch
      %14 = sbr.rel (0) target = $region13
    $region12: #{tpu_custom_call.1} parent=1 // pred_region
      _
    $region13: #{tpu_custom_call.1} parent=1 // pred_fallthru
      _
    %p15 = scmp.eq.s32.totalorder 0, 0
    // Predicated region
    $region14: #{tpu_custom_call.1} parent=1 // pred_check
      %p16 = pneg %p15
    $region15: #{tpu_custom_call.1} parent=1 // pred_check_branch
      %18 = sbr.rel (%p16) target = $region17
    $region16: #{tpu_custom_call.1} parent=1 // pred_region
      %s19 = scalar_lea.smem [#allocation2], 0
      %20 = sst [smem:[%s19]] 0.0
    $region17: #{tpu_custom_call.1} parent=1 // pred_fallthru
      _
    %v21 = vld [vmem:[%s0] sm:$0xff]
    %v22 = vld [vmem:[%s1] sm:$0xff]
    %v23 = vld [vmem:[%s2] sm:$0x1]
    %vm24 = vcmask 130048
    %v25 = vsel %vm24, %v21, -inf
    %26 = vmax.xlane.f32.xlu0 %v25
    %v27 = vpop.xlane.xlu0 %26
    %v28 = vsub.f32 %v21, %v27
    %v29 = vmul.f32 %v28, 1.442695
    %v30 = vpow.pop %v29
    %v31 = vsel %vm24, %v30, 0.0
    %32 = vadd.xlane.f32.xlu0 %v31
    %v33 = vpop.xlane.xlu0 %32
    %v34 = vlog2.pop %v33
    %v35 = vmul.f32 %v34, 0.6931472
    %v36 = vadd.f32 %v27, %v35
    %v37 = vlaneseq
    %v38 = vand.u32 %v37, 127
    %39 = vset.pattern.permute.xlu0 0
    %40 = vperm.xlu0 %39, %v22
    %v41 = vpop.permute.xlu0 %40
    %vm42 = vcmp.eq.s32.totalorder %v38, %v41
    %v43 = vsel %vm42, 1, 0
    %v44 = vcvt.s32.f32 %v43
    %v45 = vmul.f32 %v21, %v44
    %v46 = vsel %vm24, %v45, 0.0
    %47 = vadd.xlane.f32.xlu0 %v46
    %v48 = vpop.xlane.xlu0 %47
    %v50 = vperm.slane %v23, 0
    %v52 = vmul.f32 %v50, %v44
    %v53 = vsel %vm24, %v52, 0.0
    %54 = vadd.xlane.f32.xlu0 %v53
    %v55 = vpop.xlane.xlu0 %54
    %v56 = vsub.f32 %v36, %v48
    %v57 = vmax.f32 %v56, 0.0
    %v58 = vsub.f32 0.0, %v57
    %v59 = vmul.f32 %v58, 1.442695
    %v60 = vpow.pop %v59
    %v61 = vsub.f32 1.0, %v60
    %v62 = vmul.f32 %v61, %v61
    %v63 = vmul.f32 %v55, %v62
    %v64 = vmul.f32 %v63, %v57
    %s65 = smul.u32 0, 8
    %v66 = vlaneseq
    %v67 = vshrl.u32 %v66, 7
    %v68 = vstv %s65
    %v69 = vadd.s32 %v68, %v67
    %vm70 = vcmp.lt.s32.totalorder %v69, 8
    %v71 = vsel %vm70, %v64, 0.0
    %s72 = sld [smem:[#allocation2]]
    %vm73 = vcmask 7168
    %v74 = vsel %vm73, %v71, 0.0
    %75 = vadd.xlane.f32.xlu0 %v74
    %v76 = vpop.xlane.xlu0 %75
    %v77 = vrot.slane %v76, 4
    %v78 = vadd.f32 %v76, %v77
    %v79 = vrot.slane %v78, 2
    %v80 = vadd.f32 %v78, %v79
    %v81 = vrot.slane %v80, 1
    %v82 = vadd.f32 %v80, %v81
    %s83 = vtos %v82
    %s84 = sadd.f32 %s72, %s83
    %s85 = scalar_lea.smem [#allocation2], 0
    %86 = sst [smem:[%s85]] %s84
    // Predicated region
    $region18: #{tpu_custom_call.1} parent=1 // pred_check
      %p87 = pneg %p15
    $region19: #{tpu_custom_call.1} parent=1 // pred_check_branch
      %89 = sbr.rel (%p87) target = $region21
    $region20: #{tpu_custom_call.1} parent=1 // pred_region
      %s90 = sld [smem:[#allocation2]]
      %s91 = smul.f32 %s90, 0.125
      %s92 = scalar_lea.smem [#allocation3], 0
      %93 = sst [smem:[%s92]] %s91
    $region21: #{tpu_custom_call.1} parent=1 // pred_fallthru
      _
    // Predicated region
    $region22: #{tpu_custom_call.1} parent=1 // pred_check
      _
    $region23: #{tpu_custom_call.1} parent=1 // pred_check_branch
      %95 = sbr.rel (0) target = $region25
    $region24: #{tpu_custom_call.1} parent=1 // pred_region
      %97 = vsyncadd [#allocation4], 0
      %s99 = sshll.u32 %s3, 4
      %s100 = int_to_ptr.hbm [resolvable:$true] %s99
      %102 = dma.smem_to_hbm [#allocation3], 16, %s100, [#allocation4]
    $region25: #{tpu_custom_call.1} parent=1 // pred_fallthru
      _
    // Predicated region
    $region26: #{tpu_custom_call.1} parent=1 // pred_check
      _
    $region27: #{tpu_custom_call.1} parent=1 // pred_check_branch
      %104 = sbr.rel (0) target = $region29
    $region28: #{tpu_custom_call.1} parent=1 // pred_region
      %106 = dma.done [#allocation4], 16
    $region29: #{tpu_custom_call.1} parent=1 // pred_fallthru
      _
    %107 = sfence
    %108 = vsyncpa [#allocation4], 1

</llo_original>
